<compile_context>
chip_gen: v6e
topology: v6e:2x2x1
jax: 0.10.0
libtpu: 0.0.40
codegen_flags: <defaults>
</compile_context>

<pallas_src>
import functools

import jax
import jax.numpy as jnp
from jax.experimental import pallas as pl
from jax.experimental.pallas import tpu as pltpu

EPS = 1e-5


def _resblock_kernel(x_ref, wst1_ref, wst2_ref, vecs_ref, red_ref, bcast_ref,
                     out_ref, lhs_ref, *, n_img, img_h):
    # x_ref:     (N*H, W*C)   f32 lane-dense activation slab, rows = (n, h)
    # wst*_ref:  (3*W*C, W*C) bf16 K-stacked banded conv weights (kh-major)
    # vecs_ref:  (8, W*C)     f32 rows: b1, g1, be1, b2, g2, be2, 0, 0
    # red_ref:   (W*C, C)     f32 lane-group -> channel reduce (incl. 1/(N*H*W))
    # bcast_ref: (C, W*C)     f32 channel -> lane broadcast
    # out_ref:   (N*H, W*C)   f32
    # lhs_ref:   (N*H, 3*W*C) f32 VMEM scratch: kh-im2col slab, reused by both convs
    NH, WC = x_ref.shape
    H = img_h

    def build_im2col(src):
        # src: (NH, WC) f32.  lhs lanes are [kh*WC + w*C + c] with
        # kh = 0: input row h-1, kh = 1: row h, kh = 2: row h+1.
        # Per-image H halo rows (zeroed once below) are never overwritten.
        lhs_ref[:, WC:2 * WC] = src                               # center tap
        for n in range(n_img):
            r0 = n * H
            # top tap: output row h reads input row h-1 (zero at h == 0)
            lhs_ref[r0 + 1:r0 + H, 0:WC] = src[r0:r0 + H - 1, :]
            # bottom tap: output row h reads input row h+1 (zero at h == H-1)
            lhs_ref[r0:r0 + H - 1, 2 * WC:3 * WC] = src[r0 + 1:r0 + H, :]

    def conv3x3(wst_ref, bias):
        # One K-stacked MXU matmul per conv: kh-tap accumulation happens inside
        # the MXU; kw taps + CxC channel mixing live in the banded weights
        # ('SAME' W-boundary baked into the band structure).  bf16 in, f32 acc.
        lhs = lhs_ref[...].astype(jnp.bfloat16)
        y = jnp.dot(lhs, wst_ref[...], preferred_element_type=jnp.float32)
        return y + bias

    def batchnorm(y, gamma, beta):
        # Training-mode batch statistics, single pass and all in f32:
        # stack per-lane sum / sum-of-squares into one (2, WC) LHS, reduce the
        # W lane-groups per channel with a skinny matmul, broadcast back.
        s = jnp.concatenate([jnp.sum(y, axis=0, keepdims=True),
                             jnp.sum(y * y, axis=0, keepdims=True)], axis=0)
        st_c = jnp.dot(s, red_ref[...], preferred_element_type=jnp.float32)
        st = jnp.dot(st_c, bcast_ref[...], preferred_element_type=jnp.float32)
        mean = st[0:1, :]
        var = st[1:2, :] - mean * mean            # biased variance (f32)
        scale = jax.lax.rsqrt(var + EPS) * gamma
        return (y - mean) * scale + beta

    x = x_ref[...]                                # residual kept in f32

    # Zero the per-image H-halo rows once; both convs reuse them.
    zrow = jnp.zeros((1, WC), jnp.float32)
    for n in range(n_img):
        r0 = n * H
        lhs_ref[r0:r0 + 1, 0:WC] = zrow
        lhs_ref[r0 + H - 1:r0 + H, 2 * WC:3 * WC] = zrow

    # Branch 1: conv1 -> bn1 -> relu
    build_im2col(x)
    y1 = jnp.maximum(
        batchnorm(conv3x3(wst1_ref, vecs_ref[0:1, :]),
                  vecs_ref[1:2, :], vecs_ref[2:3, :]), 0.0)

    # Branch 2: conv2 -> bn2, then residual add + final ReLU.
    build_im2col(y1)
    y2 = batchnorm(conv3x3(wst2_ref, vecs_ref[3:4, :]),
                   vecs_ref[4:5, :], vecs_ref[5:6, :])
    out_ref[...] = jnp.maximum(y2 + x, 0.0)


def _stacked_band_weights(w_hwio, width):
    """Fold kw taps + CxC channel mixing of a 3x3 'SAME' conv into a K-stacked
    (3*W*C, W*C) matrix (kh-major), block-banded over W:
    band[kh][wi*C+ci, wo*C+co] = w[kh, wi-wo+1, ci, co] when 0 <= wi-wo+1 <= 2,
    else 0 (W boundary handling)."""
    c = w_hwio.shape[2]
    wi = jnp.arange(width)[:, None]
    wo = jnp.arange(width)[None, :]
    kw = wi - wo + 1                               # input col = wo + kw - 1
    valid = ((kw >= 0) & (kw <= 2)).astype(w_hwio.dtype)
    blocks = w_hwio[:, jnp.clip(kw, 0, 2)]         # (3, W, W, C, C)
    blocks = blocks * valid[None, :, :, None, None]
    # index order [kh, wi, ci, wo, co] -> (3, W*C, W*C) -> (3*W*C, W*C)
    band = blocks.transpose(0, 1, 3, 2, 4).reshape(3, width * c, width * c)
    return band.reshape(3 * width * c, width * c)


def prepare_params(params, x_shape):
    """Precompute the packed kernel operands ONCE (outside the jitted hot
    path): bf16 stacked banded conv weights, lane-tiled bias/BN vectors, and
    the skinny BN reduce/broadcast matrices."""
    N, C, H, W = x_shape
    WC = W * C

    def lanes(v):                                   # (C,) -> (WC,), channels fastest
        return jnp.tile(v.reshape(-1), W).astype(jnp.float32)

    eye = jnp.eye(C, dtype=jnp.float32)
    return {
        "wst1": _stacked_band_weights(params["w1"], W).astype(jnp.bfloat16),
        "wst2": _stacked_band_weights(params["w2"], W).astype(jnp.bfloat16),
        "vecs": jnp.stack([lanes(params["b1"]), lanes(params["g1"]),
                           lanes(params["be1"]), lanes(params["b2"]),
                           lanes(params["g2"]), lanes(params["be2"]),
                           jnp.zeros((WC,), jnp.float32),
                           jnp.zeros((WC,), jnp.float32)], axis=0),
        "red": jnp.tile(eye, (W, 1)) / float(N * H * W),   # (WC, C)
        "bcast": jnp.tile(eye, (1, W)),                    # (C, WC)
    }


def residual_block_slab(x_slab, prep, *, n_img, img_h):
    """Pallas entry point on the lane-dense (N*H, W*C) activation slab."""
    NH, WC = x_slab.shape
    inputs = (x_slab, prep["wst1"], prep["wst2"], prep["vecs"],
              prep["red"], prep["bcast"])

    def full_spec(a):
        nd = a.ndim
        return pl.BlockSpec(a.shape, lambda i, _nd=nd: (0,) * _nd)

    kernel = functools.partial(_resblock_kernel, n_img=n_img, img_h=img_h)
    return pl.pallas_call(
        kernel,
        out_shape=jax.ShapeDtypeStruct((NH, WC), jnp.float32),
        grid=(1,),
        in_specs=[full_spec(a) for a in inputs],
        out_specs=pl.BlockSpec((NH, WC), lambda i: (0, 0)),
        scratch_shapes=[pltpu.VMEM((NH, 3 * WC), jnp.float32)],
        compiler_params=pltpu.CompilerParams(
            dimension_semantics=("arbitrary",)),
    )(*inputs)


def residual_block_pallas(x_nchw, prep):
    """NCHW adapter (matches the PyTorch module interface)."""
    N, C, H, W = x_nchw.shape
    # TODO(synk): in a multi-block network keep activations in this lane-dense
    # (N*H, W*C) slab across layers (or fuse the relayout into the kernel via
    # allow_input_fusion) so these two transposes -- a full HBM read+write
    # each -- are paid once per network instead of once per block.
    x_slab = jnp.transpose(x_nchw, (0, 2, 3, 1)).reshape(N * H, W * C)
    out_slab = residual_block_slab(x_slab, prep, n_img=N, img_h=H)
    return jnp.transpose(out_slab.reshape(N, H, W, C), (0, 3, 1, 2))


def residual_block_reference(x_nchw, params):
    """Pure-JAX f32 reference matching the PyTorch forward (training-mode BN)."""
    w1, b1, g1, be1 = params["w1"], params["b1"], params["g1"], params["be1"]
    w2, b2, g2, be2 = params["w2"], params["b2"], params["g2"], params["be2"]
    x = jnp.transpose(x_nchw, (0, 2, 3, 1))

    def conv(y, w, b):
        out = jax.lax.conv_general_dilated(
            y, w, window_strides=(1, 1), padding="SAME",
            dimension_numbers=("NHWC", "HWIO", "NHWC"))
        return out + b.reshape(1, 1, 1, -1)

    def bn(y, g, be):
        mean = jnp.mean(y, axis=(0, 1, 2), keepdims=True)
        var = jnp.mean((y - mean) ** 2, axis=(0, 1, 2), keepdims=True)
        return ((y - mean) * jax.lax.rsqrt(var + EPS)
                * g.reshape(1, 1, 1, -1) + be.reshape(1, 1, 1, -1))

    out = jnp.maximum(bn(conv(x, w1, b1), g1, be1), 0.0)
    out = bn(conv(out, w2, b2), g2, be2) + x
    out = jnp.maximum(out, 0.0)
    return jnp.transpose(out, (0, 3, 1, 2))


if __name__ == "__main__":
    N, C, H, W = 2, 4, 16, 16
    key = jax.random.PRNGKey(0)
    ks = jax.random.split(key, 9)

    x = jax.random.normal(ks[0], (N, C, H, W), jnp.float32)
    params = {
        "w1": 0.1 * jax.random.normal(ks[1], (3, 3, C, C), jnp.float32),
        "b1": 0.1 * jax.random.normal(ks[2], (C,), jnp.float32),
        "g1": 1.0 + 0.1 * jax.random.normal(ks[3], (C,), jnp.float32),
        "be1": 0.1 * jax.random.normal(ks[4], (C,), jnp.float32),
        "w2": 0.1 * jax.random.normal(ks[5], (3, 3, C, C), jnp.float32),
        "b2": 0.1 * jax.random.normal(ks[6], (C,), jnp.float32),
        "g2": 1.0 + 0.1 * jax.random.normal(ks[7], (C,), jnp.float32),
        "be2": 0.1 * jax.random.normal(ks[8], (C,), jnp.float32),
    }

    # Weight packing is done once, outside the jitted forward.
    prep = jax.tree_util.tree_map(jax.block_until_ready,
                                  prepare_params(params, x.shape))

    fwd = jax.jit(residual_block_pallas)
    out = jax.block_until_ready(fwd(x, prep))
    ref = jax.block_until_ready(jax.jit(residual_block_reference)(x, params))

    # Tolerance reflects the bf16 conv matmuls vs. the f32 reference
    # (expected ~1e-2 level precision loss); structural errors would be O(1).
    if not jnp.allclose(out, ref, atol=5e-2, rtol=5e-2):
        max_err = float(jnp.max(jnp.abs(out - ref)))
        raise AssertionError(f"Pallas kernel mismatch, max abs err = {max_err}")

    print("KERNEL_OK")
</pallas_src>

<mosaic_0001>
module attributes {stable_mosaic.version = 11 : i64} {
  func.func @_resblock_kernel(%arg0: i32, %arg1: memref<32x64xf32, #tpu.memory_space<vmem>>, %arg2: memref<192x64xbf16, #tpu.memory_space<vmem>>, %arg3: memref<192x64xbf16, #tpu.memory_space<vmem>>, %arg4: memref<8x64xf32, #tpu.memory_space<vmem>>, %arg5: memref<64x4xf32, #tpu.memory_space<vmem>>, %arg6: memref<4x64xf32, #tpu.memory_space<vmem>>, %arg7: memref<32x64xf32, #tpu.memory_space<vmem>>, %arg8: memref<32x192xf32, #tpu.memory_space<vmem>>) attributes {dimension_semantics = [#tpu.dimension_semantics<arbitrary>], iteration_bounds = array<i64: 1>, scalar_prefetch = 0 : i64, scratch_operands = 1 : i64, tpu.core_type = #tpu.core_type<tc>, window_params = [{pipeline_mode = #tpu.pipeline_mode<synchronous>, transform_indices = @transform_0, window_bounds = array<i64: 32, 64>}, {pipeline_mode = #tpu.pipeline_mode<synchronous>, transform_indices = @transform_1, window_bounds = array<i64: 192, 64>}, {pipeline_mode = #tpu.pipeline_mode<synchronous>, transform_indices = @transform_2, window_bounds = array<i64: 192, 64>}, {pipeline_mode = #tpu.pipeline_mode<synchronous>, transform_indices = @transform_3, window_bounds = array<i64: 8, 64>}, {pipeline_mode = #tpu.pipeline_mode<synchronous>, transform_indices = @transform_4, window_bounds = array<i64: 64, 4>}, {pipeline_mode = #tpu.pipeline_mode<synchronous>, transform_indices = @transform_5, window_bounds = array<i64: 4, 64>}, {pipeline_mode = #tpu.pipeline_mode<synchronous>, transform_indices = @transform_6, window_bounds = array<i64: 32, 64>}]} {
    %c0 = arith.constant 0 : index
    %c0_0 = arith.constant 0 : index
    %0 = vector.load %arg1[%c0, %c0_0] : memref<32x64xf32, #tpu.memory_space<vmem>>, vector<32x64xf32>
    %cst = arith.constant 0.000000e+00 : f32
    %1 = vector.broadcast %cst : f32 to vector<1x64xf32>
    %c0_1 = arith.constant 0 : index
    %c0_2 = arith.constant 0 : index
    %2 = vector.load %arg8[%c0_1, %c0_2] : memref<32x192xf32, #tpu.memory_space<vmem>>, vector<1x64xf32>
    tpu.vector_store %arg8[%c0_1, %c0_2], %1 {strides = array<i32>} : memref<32x192xf32, #tpu.memory_space<vmem>>, vector<1x64xf32>,
    %c15 = arith.constant 15 : index
    %c128 = arith.constant 128 : index
    %3 = vector.load %arg8[%c15, %c128] : memref<32x192xf32, #tpu.memory_space<vmem>>, vector<1x64xf32>
    tpu.vector_store %arg8[%c15, %c128], %1 {strides = array<i32>} : memref<32x192xf32, #tpu.memory_space<vmem>>, vector<1x64xf32>,
    %c16 = arith.constant 16 : index
    %c0_3 = arith.constant 0 : index
    %4 = vector.load %arg8[%c16, %c0_3] : memref<32x192xf32, #tpu.memory_space<vmem>>, vector<1x64xf32>
    tpu.vector_store %arg8[%c16, %c0_3], %1 {strides = array<i32>} : memref<32x192xf32, #tpu.memory_space<vmem>>, vector<1x64xf32>,
    %c31 = arith.constant 31 : index
    %c128_4 = arith.constant 128 : index
    %5 = vector.load %arg8[%c31, %c128_4] : memref<32x192xf32, #tpu.memory_space<vmem>>, vector<1x64xf32>
    tpu.vector_store %arg8[%c31, %c128_4], %1 {strides = array<i32>} : memref<32x192xf32, #tpu.memory_space<vmem>>, vector<1x64xf32>,
    %c0_5 = arith.constant 0 : index
    %c64 = arith.constant 64 : index
    %6 = vector.load %arg8[%c0_5, %c64] : memref<32x192xf32, #tpu.memory_space<vmem>>, vector<32x64xf32>
    tpu.vector_store %arg8[%c0_5, %c64], %0 {strides = array<i32>} : memref<32x192xf32, #tpu.memory_space<vmem>>, vector<32x64xf32>,
    %7 = vector.extract_strided_slice %0 {offsets = [0, 0], sizes = [15, 64], strides = [1, 1]} : vector<32x64xf32> to vector<15x64xf32>
    %c1 = arith.constant 1 : index
    %c0_6 = arith.constant 0 : index
    %8 = vector.load %arg8[%c1, %c0_6] : memref<32x192xf32, #tpu.memory_space<vmem>>, vector<15x64xf32>
    tpu.vector_store %arg8[%c1, %c0_6], %7 {strides = array<i32>} : memref<32x192xf32, #tpu.memory_space<vmem>>, vector<15x64xf32>,
    %9 = vector.extract_strided_slice %0 {offsets = [1, 0], sizes = [15, 64], strides = [1, 1]} : vector<32x64xf32> to vector<15x64xf32>
    %c0_7 = arith.constant 0 : index
    %c128_8 = arith.constant 128 : index
    %10 = vector.load %arg8[%c0_7, %c128_8] : memref<32x192xf32, #tpu.memory_space<vmem>>, vector<15x64xf32>
    tpu.vector_store %arg8[%c0_7, %c128_8], %9 {strides = array<i32>} : memref<32x192xf32, #tpu.memory_space<vmem>>, vector<15x64xf32>,
    %11 = vector.extract_strided_slice %0 {offsets = [16, 0], sizes = [15, 64], strides = [1, 1]} : vector<32x64xf32> to vector<15x64xf32>
    %c17 = arith.constant 17 : index
    %c0_9 = arith.constant 0 : index
    %12 = vector.load %arg8[%c17, %c0_9] : memref<32x192xf32, #tpu.memory_space<vmem>>, vector<15x64xf32>
    tpu.vector_store %arg8[%c17, %c0_9], %11 {strides = array<i32>} : memref<32x192xf32, #tpu.memory_space<vmem>>, vector<15x64xf32>,
    %13 = vector.extract_strided_slice %0 {offsets = [17, 0], sizes = [15, 64], strides = [1, 1]} : vector<32x64xf32> to vector<15x64xf32>
    %c16_10 = arith.constant 16 : index
    %c128_11 = arith.constant 128 : index
    %14 = vector.load %arg8[%c16_10, %c128_11] : memref<32x192xf32, #tpu.memory_space<vmem>>, vector<15x64xf32>
    tpu.vector_store %arg8[%c16_10, %c128_11], %13 {strides = array<i32>} : memref<32x192xf32, #tpu.memory_space<vmem>>, vector<15x64xf32>,
    %c0_12 = arith.constant 0 : index
    %c0_13 = arith.constant 0 : index
    %15 = vector.load %arg4[%c0_12, %c0_13] : memref<8x64xf32, #tpu.memory_space<vmem>>, vector<1x64xf32>
    %c0_14 = arith.constant 0 : index
    %c0_15 = arith.constant 0 : index
    %16 = vector.load %arg8[%c0_14, %c0_15] : memref<32x192xf32, #tpu.memory_space<vmem>>, vector<32x192xf32>
    %17 = arith.truncf %16 : vector<32x192xf32> to vector<32x192xbf16>
    %c0_16 = arith.constant 0 : index
    %c0_17 = arith.constant 0 : index
    %18 = vector.load %arg2[%c0_16, %c0_17] : memref<192x64xbf16, #tpu.memory_space<vmem>>, vector<192x64xbf16>
    %cst_18 = arith.constant dense<0.000000e+00> : vector<32x64xf32>
    %19 = tpu.matmul %17, %18, %cst_18 {dimension_numbers = #tpu.dot_dimension_numbers<[1], [0], [0], [1], [0, 0, 1, 1], [], []>} : vector<32x192xbf16>, vector<192x64xbf16>, vector<32x64xf32> -> vector<32x64xf32>
    %20 = vector.broadcast %15 : vector<1x64xf32> to vector<32x64xf32>
    %21 = arith.addf %19, %20 : vector<32x64xf32>
    %c1_19 = arith.constant 1 : index
    %c0_20 = arith.constant 0 : index
    %22 = vector.load %arg4[%c1_19, %c0_20] : memref<8x64xf32, #tpu.memory_space<vmem>>, vector<1x64xf32>
    %c2 = arith.constant 2 : index
    %c0_21 = arith.constant 0 : index
    %23 = vector.load %arg4[%c2, %c0_21] : memref<8x64xf32, #tpu.memory_space<vmem>>, vector<1x64xf32>
    %cst_22 = arith.constant dense<0.000000e+00> : vector<64xf32>
    %24 = vector.multi_reduction <add>, %21, %cst_22 [0] : vector<32x64xf32> to vector<64xf32>
    %25 = vector.shape_cast %24 : vector<64xf32> to vector<1x64xf32>
    %26 = arith.mulf %21, %21 : vector<32x64xf32>
    %cst_23 = arith.constant dense<0.000000e+00> : vector<64xf32>
    %27 = vector.multi_reduction <add>, %26, %cst_23 [0] : vector<32x64xf32> to vector<64xf32>
    %28 = vector.shape_cast %27 : vector<64xf32> to vector<1x64xf32>
    %29 = tpu.concatenate %25, %28 in 0 : vector<1x64xf32>, vector<1x64xf32> -> vector<2x64xf32>
    %c0_24 = arith.constant 0 : index
    %c0_25 = arith.constant 0 : index
    %30 = vector.load %arg5[%c0_24, %c0_25] : memref<64x4xf32, #tpu.memory_space<vmem>>, vector<64x4xf32>
    %cst_26 = arith.constant dense<0.000000e+00> : vector<2x4xf32>
    %31 = tpu.matmul %29, %30, %cst_26 {dimension_numbers = #tpu.dot_dimension_numbers<[1], [0], [0], [1], [0, 0, 1, 1], [], []>} : vector<2x64xf32>, vector<64x4xf32>, vector<2x4xf32> -> vector<2x4xf32>
    %c0_27 = arith.constant 0 : index
    %c0_28 = arith.constant 0 : index
    %32 = vector.load %arg6[%c0_27, %c0_28] : memref<4x64xf32, #tpu.memory_space<vmem>>, vector<4x64xf32>
    %cst_29 = arith.constant dense<0.000000e+00> : vector<2x64xf32>
    %33 = tpu.matmul %31, %32, %cst_29 {dimension_numbers = #tpu.dot_dimension_numbers<[1], [0], [0], [1], [0, 0, 1, 1], [], []>} : vector<2x4xf32>, vector<4x64xf32>, vector<2x64xf32> -> vector<2x64xf32>
    %34 = vector.extract_strided_slice %33 {offsets = [0, 0], sizes = [1, 64], strides = [1, 1]} : vector<2x64xf32> to vector<1x64xf32>
    %35 = vector.extract_strided_slice %33 {offsets = [1, 0], sizes = [1, 64], strides = [1, 1]} : vector<2x64xf32> to vector<1x64xf32>
    %36 = arith.mulf %34, %34 : vector<1x64xf32>
    %37 = arith.subf %35, %36 : vector<1x64xf32>
    %cst_30 = arith.constant 9.99999974E-6 : f32
    %38 = vector.broadcast %cst_30 : f32 to vector<1x64xf32>
    %39 = arith.addf %37, %38 : vector<1x64xf32>
    %40 = math.rsqrt %39 : vector<1x64xf32>
    %41 = arith.mulf %40, %22 : vector<1x64xf32>
    %42 = vector.broadcast %34 : vector<1x64xf32> to vector<32x64xf32>
    %43 = arith.subf %21, %42 : vector<32x64xf32>
    %44 = vector.broadcast %41 : vector<1x64xf32> to vector<32x64xf32>
    %45 = arith.mulf %43, %44 : vector<32x64xf32>
    %46 = vector.broadcast %23 : vector<1x64xf32> to vector<32x64xf32>
    %47 = arith.addf %45, %46 : vector<32x64xf32>
    %cst_31 = arith.constant 0.000000e+00 : f32
    %48 = vector.broadcast %cst_31 : f32 to vector<32x64xf32>
    %49 = arith.maximumf %47, %48 : vector<32x64xf32>
    %c0_32 = arith.constant 0 : index
    %c64_33 = arith.constant 64 : index
    %50 = vector.load %arg8[%c0_32, %c64_33] : memref<32x192xf32, #tpu.memory_space<vmem>>, vector<32x64xf32>
    tpu.vector_store %arg8[%c0_32, %c64_33], %49 {strides = array<i32>} : memref<32x192xf32, #tpu.memory_space<vmem>>, vector<32x64xf32>,
    %51 = vector.extract_strided_slice %49 {offsets = [0, 0], sizes = [15, 64], strides = [1, 1]} : vector<32x64xf32> to vector<15x64xf32>
    %c1_34 = arith.constant 1 : index
    %c0_35 = arith.constant 0 : index
    %52 = vector.load %arg8[%c1_34, %c0_35] : memref<32x192xf32, #tpu.memory_space<vmem>>, vector<15x64xf32>
    tpu.vector_store %arg8[%c1_34, %c0_35], %51 {strides = array<i32>} : memref<32x192xf32, #tpu.memory_space<vmem>>, vector<15x64xf32>,
    %53 = vector.extract_strided_slice %49 {offsets = [1, 0], sizes = [15, 64], strides = [1, 1]} : vector<32x64xf32> to vector<15x64xf32>
    %c0_36 = arith.constant 0 : index
    %c128_37 = arith.constant 128 : index
    %54 = vector.load %arg8[%c0_36, %c128_37] : memref<32x192xf32, #tpu.memory_space<vmem>>, vector<15x64xf32>
    tpu.vector_store %arg8[%c0_36, %c128_37], %53 {strides = array<i32>} : memref<32x192xf32, #tpu.memory_space<vmem>>, vector<15x64xf32>,
    %55 = vector.extract_strided_slice %49 {offsets = [16, 0], sizes = [15, 64], strides = [1, 1]} : vector<32x64xf32> to vector<15x64xf32>
    %c17_38 = arith.constant 17 : index
    %c0_39 = arith.constant 0 : index
    %56 = vector.load %arg8[%c17_38, %c0_39] : memref<32x192xf32, #tpu.memory_space<vmem>>, vector<15x64xf32>
    tpu.vector_store %arg8[%c17_38, %c0_39], %55 {strides = array<i32>} : memref<32x192xf32, #tpu.memory_space<vmem>>, vector<15x64xf32>,
    %57 = vector.extract_strided_slice %49 {offsets = [17, 0], sizes = [15, 64], strides = [1, 1]} : vector<32x64xf32> to vector<15x64xf32>
    %c16_40 = arith.constant 16 : index
    %c128_41 = arith.constant 128 : index
    %58 = vector.load %arg8[%c16_40, %c128_41] : memref<32x192xf32, #tpu.memory_space<vmem>>, vector<15x64xf32>
    tpu.vector_store %arg8[%c16_40, %c128_41], %57 {strides = array<i32>} : memref<32x192xf32, #tpu.memory_space<vmem>>, vector<15x64xf32>,
    %c3 = arith.constant 3 : index
    %c0_42 = arith.constant 0 : index
    %59 = vector.load %arg4[%c3, %c0_42] : memref<8x64xf32, #tpu.memory_space<vmem>>, vector<1x64xf32>
    %c0_43 = arith.constant 0 : index
    %c0_44 = arith.constant 0 : index
    %60 = vector.load %arg8[%c0_43, %c0_44] : memref<32x192xf32, #tpu.memory_space<vmem>>, vector<32x192xf32>
    %61 = arith.truncf %60 : vector<32x192xf32> to vector<32x192xbf16>
    %c0_45 = arith.constant 0 : index
    %c0_46 = arith.constant 0 : index
    %62 = vector.load %arg3[%c0_45, %c0_46] : memref<192x64xbf16, #tpu.memory_space<vmem>>, vector<192x64xbf16>
    %cst_47 = arith.constant dense<0.000000e+00> : vector<32x64xf32>
    %63 = tpu.matmul %61, %62, %cst_47 {dimension_numbers = #tpu.dot_dimension_numbers<[1], [0], [0], [1], [0, 0, 1, 1], [], []>} : vector<32x192xbf16>, vector<192x64xbf16>, vector<32x64xf32> -> vector<32x64xf32>
    %64 = vector.broadcast %59 : vector<1x64xf32> to vector<32x64xf32>
    %65 = arith.addf %63, %64 : vector<32x64xf32>
    %c4 = arith.constant 4 : index
    %c0_48 = arith.constant 0 : index
    %66 = vector.load %arg4[%c4, %c0_48] : memref<8x64xf32, #tpu.memory_space<vmem>>, vector<1x64xf32>
    %c5 = arith.constant 5 : index
    %c0_49 = arith.constant 0 : index
    %67 = vector.load %arg4[%c5, %c0_49] : memref<8x64xf32, #tpu.memory_space<vmem>>, vector<1x64xf32>
    %cst_50 = arith.constant dense<0.000000e+00> : vector<64xf32>
    %68 = vector.multi_reduction <add>, %65, %cst_50 [0] : vector<32x64xf32> to vector<64xf32>
    %69 = vector.shape_cast %68 : vector<64xf32> to vector<1x64xf32>
    %70 = arith.mulf %65, %65 : vector<32x64xf32>
    %cst_51 = arith.constant dense<0.000000e+00> : vector<64xf32>
    %71 = vector.multi_reduction <add>, %70, %cst_51 [0] : vector<32x64xf32> to vector<64xf32>
    %72 = vector.shape_cast %71 : vector<64xf32> to vector<1x64xf32>
    %73 = tpu.concatenate %69, %72 in 0 : vector<1x64xf32>, vector<1x64xf32> -> vector<2x64xf32>
    %c0_52 = arith.constant 0 : index
    %c0_53 = arith.constant 0 : index
    %74 = vector.load %arg5[%c0_52, %c0_53] : memref<64x4xf32, #tpu.memory_space<vmem>>, vector<64x4xf32>
    %cst_54 = arith.constant dense<0.000000e+00> : vector<2x4xf32>
    %75 = tpu.matmul %73, %74, %cst_54 {dimension_numbers = #tpu.dot_dimension_numbers<[1], [0], [0], [1], [0, 0, 1, 1], [], []>} : vector<2x64xf32>, vector<64x4xf32>, vector<2x4xf32> -> vector<2x4xf32>
    %c0_55 = arith.constant 0 : index
    %c0_56 = arith.constant 0 : index
    %76 = vector.load %arg6[%c0_55, %c0_56] : memref<4x64xf32, #tpu.memory_space<vmem>>, vector<4x64xf32>
    %cst_57 = arith.constant dense<0.000000e+00> : vector<2x64xf32>
    %77 = tpu.matmul %75, %76, %cst_57 {dimension_numbers = #tpu.dot_dimension_numbers<[1], [0], [0], [1], [0, 0, 1, 1], [], []>} : vector<2x4xf32>, vector<4x64xf32>, vector<2x64xf32> -> vector<2x64xf32>
    %78 = vector.extract_strided_slice %77 {offsets = [0, 0], sizes = [1, 64], strides = [1, 1]} : vector<2x64xf32> to vector<1x64xf32>
    %79 = vector.extract_strided_slice %77 {offsets = [1, 0], sizes = [1, 64], strides = [1, 1]} : vector<2x64xf32> to vector<1x64xf32>
    %80 = arith.mulf %78, %78 : vector<1x64xf32>
    %81 = arith.subf %79, %80 : vector<1x64xf32>
    %cst_58 = arith.constant 9.99999974E-6 : f32
    %82 = vector.broadcast %cst_58 : f32 to vector<1x64xf32>
    %83 = arith.addf %81, %82 : vector<1x64xf32>
    %84 = math.rsqrt %83 : vector<1x64xf32>
    %85 = arith.mulf %84, %66 : vector<1x64xf32>
    %86 = vector.broadcast %78 : vector<1x64xf32> to vector<32x64xf32>
    %87 = arith.subf %65, %86 : vector<32x64xf32>
    %88 = vector.broadcast %85 : vector<1x64xf32> to vector<32x64xf32>
    %89 = arith.mulf %87, %88 : vector<32x64xf32>
    %90 = vector.broadcast %67 : vector<1x64xf32> to vector<32x64xf32>
    %91 = arith.addf %89, %90 : vector<32x64xf32>
    %92 = arith.addf %91, %0 : vector<32x64xf32>
    %cst_59 = arith.constant 0.000000e+00 : f32
    %93 = vector.broadcast %cst_59 : f32 to vector<32x64xf32>
    %94 = arith.maximumf %92, %93 : vector<32x64xf32>
    %c0_60 = arith.constant 0 : index
    %c0_61 = arith.constant 0 : index
    %95 = vector.load %arg7[%c0_60, %c0_61] : memref<32x64xf32, #tpu.memory_space<vmem>>, vector<32x64xf32>
    tpu.vector_store %arg7[%c0_60, %c0_61], %94 {strides = array<i32>} : memref<32x64xf32, #tpu.memory_space<vmem>>, vector<32x64xf32>,
    return
  }
  func.func @transform_0(%arg0: i32) -> (i32, i32) {
    %c0_i32 = arith.constant 0 : i32
    %c0_i32_0 = arith.constant 0 : i32
    %c0_i32_1 = arith.constant 0 : i32
    return %c0_i32, %c0_i32_0 : i32, i32
  }
  func.func @transform_1(%arg0: i32) -> (i32, i32) {
    %c0_i32 = arith.constant 0 : i32
    %c0_i32_0 = arith.constant 0 : i32
    %c0_i32_1 = arith.constant 0 : i32
    return %c0_i32, %c0_i32_0 : i32, i32
  }
  func.func @transform_2(%arg0: i32) -> (i32, i32) {
    %c0_i32 = arith.constant 0 : i32
    %c0_i32_0 = arith.constant 0 : i32
    %c0_i32_1 = arith.constant 0 : i32
    return %c0_i32, %c0_i32_0 : i32, i32
  }
  func.func @transform_3(%arg0: i32) -> (i32, i32) {
    %c0_i32 = arith.constant 0 : i32
    %c0_i32_0 = arith.constant 0 : i32
    %c0_i32_1 = arith.constant 0 : i32
    return %c0_i32, %c0_i32_0 : i32, i32
  }
  func.func @transform_4(%arg0: i32) -> (i32, i32) {
    %c0_i32 = arith.constant 0 : i32
    %c0_i32_0 = arith.constant 0 : i32
    %c0_i32_1 = arith.constant 0 : i32
    return %c0_i32, %c0_i32_0 : i32, i32
  }
  func.func @transform_5(%arg0: i32) -> (i32, i32) {
    %c0_i32 = arith.constant 0 : i32
    %c0_i32_0 = arith.constant 0 : i32
    %c0_i32_1 = arith.constant 0 : i32
    return %c0_i32, %c0_i32_0 : i32, i32
  }
  func.func @transform_6(%arg0: i32) -> (i32, i32) {
    %c0_i32 = arith.constant 0 : i32
    %c0_i32_0 = arith.constant 0 : i32
    %c0_i32_1 = arith.constant 0 : i32
    return %c0_i32, %c0_i32_0 : i32, i32
  }
}

</mosaic_0001>

<llo_original>
// kernel: residual_block_pallas.1
$region0: #{residual_block_pallas.1}
  #allocation0 [shape = 'u32[]', space=smem, size = 0x4, offset = 0x4, fixed_abs, tag = 'smem constant byte address 0x4 - core index']
  #allocation1 [shape = 'u32[144,128]{1,0:T(1,128)}', space=vmem, size = 0x12000, scoped, tag = 'internal scratch']
  #allocation2 [shape = 'f32[32,192]{1,0:T(8,128)}', space=vmem, size = 0x8000, scoped, tag = 'scratch operand']
  %s0 = inlined_call_operand.vmem [shape: f32[32,64], index: 0, kind: input, shape index: {}]
  %s1 = inlined_call_operand.vmem [shape: bf16[192,64], index: 1, kind: input, shape index: {}]
  %s2 = inlined_call_operand.vmem [shape: bf16[192,64], index: 2, kind: input, shape index: {}]
  %s3 = inlined_call_operand.vmem [shape: f32[8,64], index: 3, kind: input, shape index: {}]
  %s4 = inlined_call_operand.vmem [shape: f32[64,4], index: 4, kind: input, shape index: {}]
  %s5 = inlined_call_operand.vmem [shape: f32[4,64], index: 5, kind: input, shape index: {}]
  %s6 = inlined_call_operand.vmem [shape: f32[32,64], index: 6, kind: output, shape index: {}]
  %s7 = sld [smem:[#allocation0]]
  $region34: #{residual_block_pallas.1} parent=0
    _
  %s9 = ssub.s32 1, %s7
  %s10 = scalar_select 0, %s9, %s7
  // Predicated region
  $region2: #{residual_block_pallas.1} parent=0 // pred_check
    _
  $region3: #{residual_block_pallas.1} parent=0 // pred_check_branch
    %12 = sbr.rel (0) target = $region5
  $region4: #{residual_block_pallas.1} parent=0 // pred_region
    _
  $region5: #{residual_block_pallas.1} parent=0 // pred_fallthru
    _
  // Predicated region
  $region6: #{residual_block_pallas.1} parent=0 // pred_check
    _
  $region7: #{residual_block_pallas.1} parent=0 // pred_check_branch
    %14 = sbr.rel (0) target = $region9
  $region8: #{residual_block_pallas.1} parent=0 // pred_region
    _
  $region9: #{residual_block_pallas.1} parent=0 // pred_fallthru
    _
  // Predicated region
  $region10: #{residual_block_pallas.1} parent=0 // pred_check
    _
  $region11: #{residual_block_pallas.1} parent=0 // pred_check_branch
    %16 = sbr.rel (0) target = $region13
  $region12: #{residual_block_pallas.1} parent=0 // pred_region
    _
  $region13: #{residual_block_pallas.1} parent=0 // pred_fallthru
    _
  // Predicated region
  $region14: #{residual_block_pallas.1} parent=0 // pred_check
    _
  $region15: #{residual_block_pallas.1} parent=0 // pred_check_branch
    %18 = sbr.rel (0) target = $region17
  $region16: #{residual_block_pallas.1} parent=0 // pred_region
    _
  $region17: #{residual_block_pallas.1} parent=0 // pred_fallthru
    _
  // Predicated region
  $region18: #{residual_block_pallas.1} parent=0 // pred_check
    _
  $region19: #{residual_block_pallas.1} parent=0 // pred_check_branch
    %20 = sbr.rel (0) target = $region21
  $region20: #{residual_block_pallas.1} parent=0 // pred_region
    _
  $region21: #{residual_block_pallas.1} parent=0 // pred_fallthru
    _
  // Predicated region
  $region22: #{residual_block_pallas.1} parent=0 // pred_check
    _
  $region23: #{residual_block_pallas.1} parent=0 // pred_check_branch
    %22 = sbr.rel (0) target = $region25
  $region24: #{residual_block_pallas.1} parent=0 // pred_region
    _
  $region25: #{residual_block_pallas.1} parent=0 // pred_fallthru
    _
  %v24 = vld [vmem:[%s0] sm:$0xff]
  %v25 = vld [vmem:[%s0 + $0x8] sm:$0xff]
  %v26 = vld [vmem:[%s0 + $0x10] sm:$0xff]
  %v27 = vld [vmem:[%s0 + $0x18] sm:$0xff]
  %vm28 = vcmask 516096
  %29 = vst.msk [vmem:[#allocation2] sm:$0x1] %vm28, 0.0
  %30 = vst.msk [vmem:[#allocation2 + $0x1f] sm:$0x1] %vm28, 0.0
  %31 = vst.msk [vmem:[#allocation2 + $0x20] sm:$0x1] %vm28, 0.0
  %32 = vst.msk [vmem:[#allocation2 + $0x3f] sm:$0x1] %vm28, 0.0
  %37 = vrot.lane.b32.xlu0 %v24, 64
  %v38 = vpop.permute.xlu0 %37
  %39 = vrot.lane.b32.xlu0 %v25, 64
  %v40 = vpop.permute.xlu0 %39
  %41 = vrot.lane.b32.xlu0 %v26, 64
  %v42 = vpop.permute.xlu0 %41
  %43 = vrot.lane.b32.xlu0 %v27, 64
  %v44 = vpop.permute.xlu0 %43
  %vm49 = vcmask 1048064
  %50 = vst.msk [vmem:[#allocation2] sm:$0xff] %vm49, %v38
  %51 = vst.msk [vmem:[#allocation2 + $0x10] sm:$0xff] %vm49, %v40
  %52 = vst.msk [vmem:[#allocation2 + $0x20] sm:$0xff] %vm49, %v42
  %53 = vst.msk [vmem:[#allocation2 + $0x30] sm:$0xff] %vm49, %v44
  %vm54 = vcmask 1040384
  %v55 = vrot.slane %v24, 7
  %v56 = vrot.slane %v25, 7
  %v57 = vsel %vm54, %v55, %v56
  %vm60 = vcmask 523265
  %61 = vst.msk [vmem:[#allocation2] sm:$0xfe] %vm60, %v55
  %vm62 = vcmask 523264
  %63 = vst.msk [vmem:[#allocation2 + $0x10] sm:$0xff] %vm62, %v57
  %vm64 = vcmask 1046528
  %v65 = vrot.slane %v24, 1
  %v66 = vrot.slane %v25, 1
  %v67 = vsel %vm64, %v65, %v66
  %70 = vst.msk [vmem:[#allocation2 + $0x8] sm:$0xff] %vm62, %v67
  %vm71 = vcmask 522240
  %72 = vst.msk [vmem:[#allocation2 + $0x18] sm:$0x7f] %vm71, %v66
  %v73 = vrot.slane %v26, 7
  %v74 = vrot.slane %v27, 7
  %v75 = vsel %vm54, %v73, %v74
  %78 = vst.msk [vmem:[#allocation2 + $0x20] sm:$0xfe] %vm60, %v73
  %79 = vst.msk [vmem:[#allocation2 + $0x30] sm:$0xff] %vm62, %v75
  %v80 = vrot.slane %v26, 1
  %v81 = vrot.slane %v27, 1
  %v82 = vsel %vm64, %v80, %v81
  %85 = vst.msk [vmem:[#allocation2 + $0x28] sm:$0xff] %vm62, %v82
  %86 = vst.msk [vmem:[#allocation2 + $0x38] sm:$0x7f] %vm71, %v81
  %v87 = vld [vmem:[%s3] sm:$0x1]
  %v88 = vld [vmem:[#allocation2] sm:$0xff]
  %v89 = vld [vmem:[#allocation2 + $0x8] sm:$0xff]
  %v90 = vld [vmem:[#allocation2 + $0x10] sm:$0xff]
  %v91 = vld [vmem:[#allocation2 + $0x18] sm:$0xff]
  %v92 = vld [vmem:[#allocation2 + $0x20] sm:$0xff]
  %v93 = vld [vmem:[#allocation2 + $0x28] sm:$0xff]
  %v94 = vld [vmem:[#allocation2 + $0x30] sm:$0xff]
  %v95 = vld [vmem:[#allocation2 + $0x38] sm:$0xff]
  %v96 = vpack.c.bf16 %v90, %v88
  %v97 = vpack.c.bf16 %v91, %v89
  %v98 = vpack.c.bf16 %v94, %v92
  %v99 = vpack.c.bf16 %v95, %v93
  %v100 = vld [vmem:[%s1] sm:$0xf]
  %v101 = vld [vmem:[%s1 + $0x4] sm:$0xf]
  %v102 = vld [vmem:[%s1 + $0x8] sm:$0xf]
  %v103 = vld [vmem:[%s1 + $0xc] sm:$0xf]
  %v104 = vld [vmem:[%s1 + $0x10] sm:$0xf]
  %v105 = vld [vmem:[%s1 + $0x14] sm:$0xf]
  %v106 = vld [vmem:[%s1 + $0x18] sm:$0xf]
  %v107 = vld [vmem:[%s1 + $0x1c] sm:$0xf]
  %v108 = vld [vmem:[%s1 + $0x20] sm:$0xf]
  %v109 = vld [vmem:[%s1 + $0x24] sm:$0xf]
  %v110 = vld [vmem:[%s1 + $0x28] sm:$0xf]
  %v111 = vld [vmem:[%s1 + $0x2c] sm:$0xf]
  %v112 = vld [vmem:[%s1 + $0x30] sm:$0xf]
  %v113 = vld [vmem:[%s1 + $0x34] sm:$0xf]
  %v114 = vld [vmem:[%s1 + $0x38] sm:$0xf]
  %v115 = vld [vmem:[%s1 + $0x3c] sm:$0xf]
  %v116 = vld [vmem:[%s1 + $0x40] sm:$0xf]
  %v117 = vld [vmem:[%s1 + $0x44] sm:$0xf]
  %v118 = vld [vmem:[%s1 + $0x48] sm:$0xf]
  %v119 = vld [vmem:[%s1 + $0x4c] sm:$0xf]
  %v120 = vld [vmem:[%s1 + $0x50] sm:$0xf]
  %v121 = vld [vmem:[%s1 + $0x54] sm:$0xf]
  %v122 = vld [vmem:[%s1 + $0x58] sm:$0xf]
  %v123 = vld [vmem:[%s1 + $0x5c] sm:$0xf]
  %v124 = vlaneseq
  %v125 = vshrl.u32 %v124, 7
  %v126 = vsub.s32 0, %v125
  %v127 = vrot.slane %v87, %v126
  %v152 = vunpack.c.l.b16 %v100
  %v153 = vunpack.c.l.b16 %v101
  %v154 = vunpack.c.l.b16 %v102
  %v155 = vunpack.c.l.b16 %v103
  %v156 = vunpack.c.l.b16 %v104
  %v157 = vunpack.c.l.b16 %v105
  %v158 = vunpack.c.l.b16 %v106
  %v159 = vunpack.c.l.b16 %v107
  %v160 = vunpack.c.l.b16 %v108
  %v161 = vunpack.c.l.b16 %v109
  %v162 = vunpack.c.l.b16 %v110
  %v163 = vunpack.c.l.b16 %v111
  %v164 = vunpack.c.l.b16 %v112
  %v165 = vunpack.c.l.b16 %v113
  %v166 = vunpack.c.l.b16 %v114
  %v167 = vunpack.c.l.b16 %v115
  %v168 = vunpack.c.l.b16 %v116
  %v169 = vunpack.c.l.b16 %v117
  %v170 = vunpack.c.l.b16 %v118
  %v171 = vunpack.c.l.b16 %v119
  %v172 = vunpack.c.l.b16 %v120
  %v173 = vunpack.c.l.b16 %v121
  %v174 = vunpack.c.l.b16 %v122
  %v175 = vunpack.c.l.b16 %v123
  %v176 = vpack.c.b16 %v153, %v152
  %v177 = vpack.c.b16 %v155, %v154
  %v178 = vpack.c.b16 %v157, %v156
  %v179 = vpack.c.b16 %v159, %v158
  %v180 = vpack.c.b16 %v161, %v160
  %v181 = vpack.c.b16 %v163, %v162
  %v182 = vpack.c.b16 %v165, %v164
  %v183 = vpack.c.b16 %v167, %v166
  %v184 = vpack.c.b16 %v169, %v168
  %v185 = vpack.c.b16 %v171, %v170
  %v186 = vpack.c.b16 %v173, %v172
  %v187 = vpack.c.b16 %v175, %v174
  %v201 = vsel %vm62, %v97, 0
  %v204 = vsel %vm62, %v99, 0
  %206 = vmatprep.subr.bf16.mxu0 0
  %207 = vmatpush1.bf16.msra.mxu0 %v183
  %208 = vmatprep.subr.bf16.mxu0 0
  %209 = vmatpush1.bf16.msra.mxu0 %v182
  %210 = vmatprep.subr.bf16.mxu0 0
  %211 = vmatpush1.bf16.msra.mxu0 %v181
  %212 = vmatprep.subr.bf16.mxu0 0
  %213 = vmatpush1.bf16.msra.mxu0 %v180
  %214 = vmatprep.subr.bf16.mxu0 0
  %215 = vmatpush1.bf16.msra.mxu0 %v179
  %216 = vmatprep.subr.bf16.mxu0 0
  %217 = vmatpush1.bf16.msra.mxu0 %v178
  %218 = vmatprep.subr.bf16.mxu0 0
  %219 = vmatpush1.bf16.msra.mxu0 %v177
  %220 = vmatprep.subr.bf16.mxu0 0
  %221 = vmatpush1.bf16.msra.mxu0 %v176
  %222 = vmatprep.subr.bf16.mxu0 0
  %223 = vmatpush2.bf16.msra.mxu0 0
  %224 = vmatprep.subr.bf16.mxu0 0
  %225 = vmatpush2.bf16.msra.mxu0 0
  %226 = vmatprep.subr.bf16.mxu0 0
  %227 = vmatpush2.bf16.msra.mxu0 0
  %228 = vmatprep.subr.bf16.mxu0 0
  %229 = vmatpush2.bf16.msra.mxu0 0
  %230 = vmatprep.subr.bf16.mxu0 0
  %231 = vmatpush2.bf16.msra.mxu0 %v187
  %232 = vmatprep.subr.bf16.mxu0 0
  %233 = vmatpush2.bf16.msra.mxu0 %v186
  %234 = vmatprep.subr.bf16.mxu0 0
  %235 = vmatpush2.bf16.msra.mxu0 %v185
  %236 = vmatprep.subr.bf16.mxu0 0
  %237 = vmatpush2.bf16.msra.mxu0 %v184
  %238 = vmatprep.mubr.bf16.mxu0 %v201
  %239 = vmatmul.mubr.bf16.gmra.mxu0 %v96
  %v240 = vpop.f32.mrf.mxu0
  %v241 = vadd.f32 %v127, %v240
  %v242 = vpop.f32.mrf.mxu0
  %v243 = vpop.f32.mrf.mxu0
  %v244 = vadd.f32 %v127, %v243
  %v245 = vpop.f32.mrf.mxu0
  %246 = vmatprep.mubr.bf16.mxu0 %v204
  %247 = vmatmul.mubr.bf16.gmra.mxu0 %v98
  %v248 = vpop.f32.mrf.mxu0
  %v249 = vadd.f32 %v127, %v248
  %v250 = vpop.f32.mrf.mxu0
  %v251 = vpop.f32.mrf.mxu0
  %v252 = vadd.f32 %v127, %v251
  %v253 = vpop.f32.mrf.mxu0
  %254 = vdwg.mxu0
  %v255 = vld [vmem:[%s3 + $0x1] sm:$0x1]
  %v256 = vld [vmem:[%s3 + $0x2] sm:$0x1]
  %v257 = vsel %vm62, %v241, 0.0
  %v258 = vsel %vm62, %v244, 0.0
  %v259 = vadd.f32 %v257, %v258
  %v260 = vsel %vm62, %v249, 0.0
  %v261 = vadd.f32 %v259, %v260
  %v262 = vsel %vm62, %v252, 0.0
  %v263 = vadd.f32 %v261, %v262
  %v264 = vrot.slane %v263, 4
  %v265 = vadd.f32 %v263, %v264
  %v266 = vrot.slane %v265, 2
  %v267 = vadd.f32 %v265, %v266
  %v268 = vrot.slane %v267, 1
  %v269 = vadd.f32 %v267, %v268
  %v270 = vmul.f32 %v241, %v241
  %v271 = vmul.f32 %v244, %v244
  %v272 = vmul.f32 %v249, %v249
  %v273 = vmul.f32 %v252, %v252
  %v274 = vsel %vm62, %v270, 0.0
  %v275 = vsel %vm62, %v271, 0.0
  %v276 = vadd.f32 %v274, %v275
  %v277 = vsel %vm62, %v272, 0.0
  %v278 = vadd.f32 %v276, %v277
  %v279 = vsel %vm62, %v273, 0.0
  %v280 = vadd.f32 %v278, %v279
  %v281 = vrot.slane %v280, 4
  %v282 = vadd.f32 %v280, %v281
  %v283 = vrot.slane %v282, 2
  %v284 = vadd.f32 %v282, %v283
  %v285 = vrot.slane %v284, 1
  %v286 = vadd.f32 %v284, %v285
  %v287 = vsel %vm54, %v269, %v286
  %v288 = vld [vmem:[%s4] sm:$0xff]
  %v289 = vld [vmem:[%s4 + $0x8] sm:$0xff]
  %v290 = vld [vmem:[%s4 + $0x10] sm:$0xff]
  %v291 = vld [vmem:[%s4 + $0x18] sm:$0xff]
  %v292 = vld [vmem:[%s4 + $0x20] sm:$0xff]
  %v293 = vld [vmem:[%s4 + $0x28] sm:$0xff]
  %v294 = vld [vmem:[%s4 + $0x30] sm:$0xff]
  %v295 = vld [vmem:[%s4 + $0x38] sm:$0xff]
  %v297 = vsel %vm62, %v287, 0
  %299 = vmatprep.subr.mxu0 0.0
  %300 = vmatpush1.msra.mxu0 0.0
  %301 = vmatprep.subr.mxu0 0.0
  %302 = vmatpush1.msra.mxu0 0.0
  %303 = vmatprep.subr.mxu0 0.0
  %304 = vmatpush1.msra.mxu0 0.0
  %305 = vmatprep.subr.mxu0 0.0
  %306 = vmatpush1.msra.mxu0 0.0
  %307 = vmatprep.subr.mxu0 0.0
  %308 = vmatpush1.msra.mxu0 0.0
  %309 = vmatprep.subr.mxu0 0.0
  %310 = vmatpush1.msra.mxu0 0.0
  %311 = vmatprep.subr.mxu0 0.0
  %312 = vmatpush1.msra.mxu0 0.0
  %313 = vmatprep.subr.mxu0 0.0
  %314 = vmatpush1.msra.mxu0 0.0
  %315 = vmatprep.subr.mxu0 0.0
  %316 = vmatpush1.msra.mxu0 %v295
  %317 = vmatprep.subr.mxu0 0.0
  %318 = vmatpush1.msra.mxu0 %v294
  %319 = vmatprep.subr.mxu0 0.0
  %320 = vmatpush1.msra.mxu0 %v293
  %321 = vmatprep.subr.mxu0 0.0
  %322 = vmatpush1.msra.mxu0 %v292
  %323 = vmatprep.subr.mxu0 0.0
  %324 = vmatpush1.msra.mxu0 %v291
  %325 = vmatprep.subr.mxu0 0.0
  %326 = vmatpush1.msra.mxu0 %v290
  %327 = vmatprep.subr.mxu0 0.0
  %328 = vmatpush1.msra.mxu0 %v289
  %329 = vmatprep.subr.mxu0 0.0
  %330 = vmatpush1.msra.mxu0 %v288
  %331 = vmatprep.subr.mxu0 0.0
  %332 = vmatpush2.msra.mxu0 0.0
  %333 = vmatprep.subr.mxu0 0.0
  %334 = vmatpush2.msra.mxu0 0.0
  %335 = vmatprep.subr.mxu0 0.0
  %336 = vmatpush2.msra.mxu0 0.0
  %337 = vmatprep.subr.mxu0 0.0
  %338 = vmatpush2.msra.mxu0 0.0
  %339 = vmatprep.subr.mxu0 0.0
  %340 = vmatpush2.msra.mxu0 0.0
  %341 = vmatprep.subr.mxu0 0.0
  %342 = vmatpush2.msra.mxu0 0.0
  %343 = vmatprep.subr.mxu0 0.0
  %344 = vmatpush2.msra.mxu0 0.0
  %345 = vmatprep.subr.mxu0 0.0
  %346 = vmatpush2.msra.mxu0 0.0
  %347 = vmatprep.subr.mxu0 0.0
  %348 = vmatpush2.msra.mxu0 0.0
  %349 = vmatprep.subr.mxu0 0.0
  %350 = vmatpush2.msra.mxu0 0.0
  %351 = vmatprep.subr.mxu0 0.0
  %352 = vmatpush2.msra.mxu0 0.0
  %353 = vmatprep.subr.mxu0 0.0
  %354 = vmatpush2.msra.mxu0 0.0
  %355 = vmatprep.subr.mxu0 0.0
  %356 = vmatpush2.msra.mxu0 0.0
  %357 = vmatprep.subr.mxu0 0.0
  %358 = vmatpush2.msra.mxu0 0.0
  %359 = vmatprep.subr.mxu0 0.0
  %360 = vmatpush2.msra.mxu0 0.0
  %361 = vmatprep.subr.mxu0 0.0
  %362 = vmatpush2.msra.mxu0 0.0
  %363 = vmatprep.mubr.f32.mxu0 0.0
  %364 = vmatmul.mubr.f32.gmra.mxu0 %v297
  %v365 = vpop.f32.mrf.mxu0
  %v366 = vadd.f32 0.0, %v365
  %v367 = vpop.f32.mrf.mxu0
  %368 = vdwg.mxu0
  %v369 = vld [vmem:[%s5] sm:$0xf]
  %vm370 = vcmask 31744
  %v372 = vsel %vm370, %v366, 0
  %vm374 = vcmask 1043456
  %v376 = vsel %vm374, %v369, 0
  %378 = vmatprep.subr.mxu0 0.0
  %379 = vmatpush1.msra.mxu0 0.0
  %380 = vmatprep.subr.mxu0 0.0
  %381 = vmatpush1.msra.mxu0 0.0
  %382 = vmatprep.subr.mxu0 0.0
  %383 = vmatpush1.msra.mxu0 0.0
  %384 = vmatprep.subr.mxu0 0.0
  %385 = vmatpush1.msra.mxu0 0.0
  %386 = vmatprep.subr.mxu0 0.0
  %387 = vmatpush1.msra.mxu0 0.0
  %388 = vmatprep.subr.mxu0 0.0
  %389 = vmatpush1.msra.mxu0 0.0
  %390 = vmatprep.subr.mxu0 0.0
  %391 = vmatpush1.msra.mxu0 0.0
  %392 = vmatprep.subr.mxu0 0.0
  %393 = vmatpush1.msra.mxu0 0.0
  %394 = vmatprep.subr.mxu0 0.0
  %395 = vmatpush1.msra.mxu0 0.0
  %396 = vmatprep.subr.mxu0 0.0
  %397 = vmatpush1.msra.mxu0 0.0
  %398 = vmatprep.subr.mxu0 0.0
  %399 = vmatpush1.msra.mxu0 0.0
  %400 = vmatprep.subr.mxu0 0.0
  %401 = vmatpush1.msra.mxu0 0.0
  %402 = vmatprep.subr.mxu0 0.0
  %403 = vmatpush1.msra.mxu0 0.0
  %404 = vmatprep.subr.mxu0 0.0
  %405 = vmatpush1.msra.mxu0 0.0
  %406 = vmatprep.subr.mxu0 0.0
  %407 = vmatpush1.msra.mxu0 0.0
  %408 = vmatprep.subr.mxu0 0.0
  %409 = vmatpush1.msra.mxu0 %v376
  %410 = vmatprep.subr.mxu0 0.0
  %411 = vmatpush2.msra.mxu0 0.0
  %412 = vmatprep.subr.mxu0 0.0
  %413 = vmatpush2.msra.mxu0 0.0
  %414 = vmatprep.subr.mxu0 0.0
  %415 = vmatpush2.msra.mxu0 0.0
  %416 = vmatprep.subr.mxu0 0.0
  %417 = vmatpush2.msra.mxu0 0.0
  %418 = vmatprep.subr.mxu0 0.0
  %419 = vmatpush2.msra.mxu0 0.0
  %420 = vmatprep.subr.mxu0 0.0
  %421 = vmatpush2.msra.mxu0 0.0
  %422 = vmatprep.subr.mxu0 0.0
  %423 = vmatpush2.msra.mxu0 0.0
  %424 = vmatprep.subr.mxu0 0.0
  %425 = vmatpush2.msra.mxu0 0.0
  %426 = vmatprep.subr.mxu0 0.0
  %427 = vmatpush2.msra.mxu0 0.0
  %428 = vmatprep.subr.mxu0 0.0
  %429 = vmatpush2.msra.mxu0 0.0
  %430 = vmatprep.subr.mxu0 0.0
  %431 = vmatpush2.msra.mxu0 0.0
  %432 = vmatprep.subr.mxu0 0.0
  %433 = vmatpush2.msra.mxu0 0.0
  %434 = vmatprep.subr.mxu0 0.0
  %435 = vmatpush2.msra.mxu0 0.0
  %436 = vmatprep.subr.mxu0 0.0
  %437 = vmatpush2.msra.mxu0 0.0
  %438 = vmatprep.subr.mxu0 0.0
  %439 = vmatpush2.msra.mxu0 0.0
  %440 = vmatprep.subr.mxu0 0.0
  %441 = vmatpush2.msra.mxu0 0.0
  %442 = vmatprep.mubr.f32.mxu0 0.0
  %443 = vmatmul.mubr.f32.gmra.mxu0 %v372
  %v444 = vpop.f32.mrf.mxu0
  %v445 = vadd.f32 0.0, %v444
  %v446 = vpop.f32.mrf.mxu0
  %447 = vdwg.mxu0
  %v448 = vmul.f32 %v445, %v445
  %v450 = vrot.slane %v448, 7
  %v452 = vsub.f32 %v445, %v450
  %v453 = vadd.f32 %v452, 1e-05
  %v454 = vrsqrt.pop %v453
  %v456 = vrot.slane %v255, 7
  %v458 = vmul.f32 %v454, %v456
  %v459 = vlaneseq
  %v460 = vshrl.u32 %v459, 7
  %v461 = vsub.s32 0, %v460
  %v462 = vrot.slane %v445, %v461
  %v463 = vsub.f32 %v241, %v462
  %v464 = vsub.f32 %v244, %v462
  %v465 = vsub.f32 %v249, %v462
  %v466 = vsub.f32 %v252, %v462
  %v467 = vlaneseq
  %v468 = vshrl.u32 %v467, 7
  %v469 = vsub.s32 1, %v468
  %v470 = vrot.slane %v458, %v469
  %v471 = vmul.f32 %v463, %v470
  %v472 = vmul.f32 %v464, %v470
  %v473 = vmul.f32 %v465, %v470
  %v474 = vmul.f32 %v466, %v470
  %v475 = vlaneseq
  %v476 = vshrl.u32 %v475, 7
  %v477 = vsub.s32 0, %v476
  %v478 = vrot.slane %v256, %v477
  %v479 = vadd.f32 %v471, %v478
  %v480 = vadd.f32 %v472, %v478
  %v481 = vadd.f32 %v473, %v478
  %v482 = vadd.f32 %v474, %v478
  %v483 = vmax.f32 %v479, 0.0
  %v484 = vmax.f32 %v480, 0.0
  %v485 = vmax.f32 %v481, 0.0
  %v486 = vmax.f32 %v482, 0.0
  %491 = vrot.lane.b32.xlu0 %v483, 64
  %v492 = vpop.permute.xlu0 %491
  %493 = vrot.lane.b32.xlu0 %v484, 64
  %v494 = vpop.permute.xlu0 %493
  %495 = vrot.lane.b32.xlu0 %v485, 64
  %v496 = vpop.permute.xlu0 %495
  %497 = vrot.lane.b32.xlu0 %v486, 64
  %v498 = vpop.permute.xlu0 %497
  %503 = vst.msk [vmem:[#allocation2] sm:$0xff] %vm49, %v492
  %504 = vst.msk [vmem:[#allocation2 + $0x10] sm:$0xff] %vm49, %v494
  %505 = vst.msk [vmem:[#allocation2 + $0x20] sm:$0xff] %vm49, %v496
  %506 = vst.msk [vmem:[#allocation2 + $0x30] sm:$0xff] %vm49, %v498
  %v507 = vrot.slane %v483, 7
  %v508 = vrot.slane %v484, 7
  %v509 = vsel %vm54, %v507, %v508
  %512 = vst.msk [vmem:[#allocation2] sm:$0xfe] %vm60, %v507
  %513 = vst.msk [vmem:[#allocation2 + $0x10] sm:$0xff] %vm62, %v509
  %v514 = vrot.slane %v483, 1
  %v515 = vrot.slane %v484, 1
  %v516 = vsel %vm64, %v514, %v515
  %519 = vst.msk [vmem:[#allocation2 + $0x8] sm:$0xff] %vm62, %v516
  %520 = vst.msk [vmem:[#allocation2 + $0x18] sm:$0x7f] %vm71, %v515
  %v521 = vrot.slane %v485, 7
  %v522 = vrot.slane %v486, 7
  %v523 = vsel %vm54, %v521, %v522
  %526 = vst.msk [vmem:[#allocation2 + $0x20] sm:$0xfe] %vm60, %v521
  %527 = vst.msk [vmem:[#allocation2 + $0x30] sm:$0xff] %vm62, %v523
  %v528 = vrot.slane %v485, 1
  %v529 = vrot.slane %v486, 1
  %v530 = vsel %vm64, %v528, %v529
  %533 = vst.msk [vmem:[#allocation2 + $0x28] sm:$0xff] %vm62, %v530
  %534 = vst.msk [vmem:[#allocation2 + $0x38] sm:$0x7f] %vm71, %v529
  %v535 = vld [vmem:[%s3 + $0x3] sm:$0x1]
  %v536 = vld [vmem:[#allocation2] sm:$0xff]
  %v537 = vld [vmem:[#allocation2 + $0x8] sm:$0xff]
  %v538 = vld [vmem:[#allocation2 + $0x10] sm:$0xff]
  %v539 = vld [vmem:[#allocation2 + $0x18] sm:$0xff]
  %v540 = vld [vmem:[#allocation2 + $0x20] sm:$0xff]
  %v541 = vld [vmem:[#allocation2 + $0x28] sm:$0xff]
  %v542 = vld [vmem:[#allocation2 + $0x30] sm:$0xff]
  %v543 = vld [vmem:[#allocation2 + $0x38] sm:$0xff]
  %v544 = vpack.c.bf16 %v538, %v536
  %v545 = vpack.c.bf16 %v539, %v537
  %v546 = vpack.c.bf16 %v542, %v540
  %v547 = vpack.c.bf16 %v543, %v541
  %v548 = vld [vmem:[%s2] sm:$0xf]
  %v549 = vld [vmem:[%s2 + $0x4] sm:$0xf]
  %v550 = vld [vmem:[%s2 + $0x8] sm:$0xf]
  %v551 = vld [vmem:[%s2 + $0xc] sm:$0xf]
  %v552 = vld [vmem:[%s2 + $0x10] sm:$0xf]
  %v553 = vld [vmem:[%s2 + $0x14] sm:$0xf]
  %v554 = vld [vmem:[%s2 + $0x18] sm:$0xf]
  %v555 = vld [vmem:[%s2 + $0x1c] sm:$0xf]
  %v556 = vld [vmem:[%s2 + $0x20] sm:$0xf]
  %v557 = vld [vmem:[%s2 + $0x24] sm:$0xf]
  %v558 = vld [vmem:[%s2 + $0x28] sm:$0xf]
  %v559 = vld [vmem:[%s2 + $0x2c] sm:$0xf]
  %v560 = vld [vmem:[%s2 + $0x30] sm:$0xf]
  %v561 = vld [vmem:[%s2 + $0x34] sm:$0xf]
  %v562 = vld [vmem:[%s2 + $0x38] sm:$0xf]
  %v563 = vld [vmem:[%s2 + $0x3c] sm:$0xf]
  %v564 = vld [vmem:[%s2 + $0x40] sm:$0xf]
  %v565 = vld [vmem:[%s2 + $0x44] sm:$0xf]
  %v566 = vld [vmem:[%s2 + $0x48] sm:$0xf]
  %v567 = vld [vmem:[%s2 + $0x4c] sm:$0xf]
  %v568 = vld [vmem:[%s2 + $0x50] sm:$0xf]
  %v569 = vld [vmem:[%s2 + $0x54] sm:$0xf]
  %v570 = vld [vmem:[%s2 + $0x58] sm:$0xf]
  %v571 = vld [vmem:[%s2 + $0x5c] sm:$0xf]
  %v572 = vlaneseq
  %v573 = vshrl.u32 %v572, 7
  %v574 = vsub.s32 0, %v573
  %v575 = vrot.slane %v535, %v574
  %v600 = vunpack.c.l.b16 %v548
  %v601 = vunpack.c.l.b16 %v549
  %v602 = vunpack.c.l.b16 %v550
  %v603 = vunpack.c.l.b16 %v551
  %v604 = vunpack.c.l.b16 %v552
  %v605 = vunpack.c.l.b16 %v553
  %v606 = vunpack.c.l.b16 %v554
  %v607 = vunpack.c.l.b16 %v555
  %v608 = vunpack.c.l.b16 %v556
  %v609 = vunpack.c.l.b16 %v557
  %v610 = vunpack.c.l.b16 %v558
  %v611 = vunpack.c.l.b16 %v559
  %v612 = vunpack.c.l.b16 %v560
  %v613 = vunpack.c.l.b16 %v561
  %v614 = vunpack.c.l.b16 %v562
  %v615 = vunpack.c.l.b16 %v563
  %v616 = vunpack.c.l.b16 %v564
  %v617 = vunpack.c.l.b16 %v565
  %v618 = vunpack.c.l.b16 %v566
  %v619 = vunpack.c.l.b16 %v567
  %v620 = vunpack.c.l.b16 %v568
  %v621 = vunpack.c.l.b16 %v569
  %v622 = vunpack.c.l.b16 %v570
  %v623 = vunpack.c.l.b16 %v571
  %v624 = vpack.c.b16 %v601, %v600
  %v625 = vpack.c.b16 %v603, %v602
  %v626 = vpack.c.b16 %v605, %v604
  %v627 = vpack.c.b16 %v607, %v606
  %v628 = vpack.c.b16 %v609, %v608
  %v629 = vpack.c.b16 %v611, %v610
  %v630 = vpack.c.b16 %v613, %v612
  %v631 = vpack.c.b16 %v615, %v614
  %v632 = vpack.c.b16 %v617, %v616
  %v633 = vpack.c.b16 %v619, %v618
  %v634 = vpack.c.b16 %v621, %v620
  %v635 = vpack.c.b16 %v623, %v622
  %v649 = vsel %vm62, %v545, 0
  %v652 = vsel %vm62, %v547, 0
  %654 = vmatprep.subr.bf16.mxu0 0
  %655 = vmatpush1.bf16.msra.mxu0 %v631
  %656 = vmatprep.subr.bf16.mxu0 0
  %657 = vmatpush1.bf16.msra.mxu0 %v630
  %658 = vmatprep.subr.bf16.mxu0 0
  %659 = vmatpush1.bf16.msra.mxu0 %v629
  %660 = vmatprep.subr.bf16.mxu0 0
  %661 = vmatpush1.bf16.msra.mxu0 %v628
  %662 = vmatprep.subr.bf16.mxu0 0
  %663 = vmatpush1.bf16.msra.mxu0 %v627
  %664 = vmatprep.subr.bf16.mxu0 0
  %665 = vmatpush1.bf16.msra.mxu0 %v626
  %666 = vmatprep.subr.bf16.mxu0 0
  %667 = vmatpush1.bf16.msra.mxu0 %v625
  %668 = vmatprep.subr.bf16.mxu0 0
  %669 = vmatpush1.bf16.msra.mxu0 %v624
  %670 = vmatprep.subr.bf16.mxu0 0
  %671 = vmatpush2.bf16.msra.mxu0 0
  %672 = vmatprep.subr.bf16.mxu0 0
  %673 = vmatpush2.bf16.msra.mxu0 0
  %674 = vmatprep.subr.bf16.mxu0 0
  %675 = vmatpush2.bf16.msra.mxu0 0
  %676 = vmatprep.subr.bf16.mxu0 0
  %677 = vmatpush2.bf16.msra.mxu0 0
  %678 = vmatprep.subr.bf16.mxu0 0
  %679 = vmatpush2.bf16.msra.mxu0 %v635
  %680 = vmatprep.subr.bf16.mxu0 0
  %681 = vmatpush2.bf16.msra.mxu0 %v634
  %682 = vmatprep.subr.bf16.mxu0 0
  %683 = vmatpush2.bf16.msra.mxu0 %v633
  %684 = vmatprep.subr.bf16.mxu0 0
  %685 = vmatpush2.bf16.msra.mxu0 %v632
  %686 = vmatprep.mubr.bf16.mxu0 %v649
  %687 = vmatmul.mubr.bf16.gmra.mxu0 %v544
  %v688 = vpop.f32.mrf.mxu0
  %v689 = vadd.f32 %v575, %v688
  %v690 = vpop.f32.mrf.mxu0
  %v691 = vpop.f32.mrf.mxu0
  %v692 = vadd.f32 %v575, %v691
  %v693 = vpop.f32.mrf.mxu0
  %694 = vmatprep.mubr.bf16.mxu0 %v652
  %695 = vmatmul.mubr.bf16.gmra.mxu0 %v546
  %v696 = vpop.f32.mrf.mxu0
  %v697 = vadd.f32 %v575, %v696
  %v698 = vpop.f32.mrf.mxu0
  %v699 = vpop.f32.mrf.mxu0
  %v700 = vadd.f32 %v575, %v699
  %v701 = vpop.f32.mrf.mxu0
  %702 = vdwg.mxu0
  %v703 = vld [vmem:[%s3 + $0x4] sm:$0x1]
  %v704 = vld [vmem:[%s3 + $0x5] sm:$0x1]
  %v705 = vsel %vm62, %v689, 0.0
  %v706 = vsel %vm62, %v692, 0.0
  %v707 = vadd.f32 %v705, %v706
  %v708 = vsel %vm62, %v697, 0.0
  %v709 = vadd.f32 %v707, %v708
  %v710 = vsel %vm62, %v700, 0.0
  %v711 = vadd.f32 %v709, %v710
  %v712 = vrot.slane %v711, 4
  %v713 = vadd.f32 %v711, %v712
  %v714 = vrot.slane %v713, 2
  %v715 = vadd.f32 %v713, %v714
  %v716 = vrot.slane %v715, 1
  %v717 = vadd.f32 %v715, %v716
  %v718 = vmul.f32 %v689, %v689
  %v719 = vmul.f32 %v692, %v692
  %v720 = vmul.f32 %v697, %v697
  %v721 = vmul.f32 %v700, %v700
  %v722 = vsel %vm62, %v718, 0.0
  %v723 = vsel %vm62, %v719, 0.0
  %v724 = vadd.f32 %v722, %v723
  %v725 = vsel %vm62, %v720, 0.0
  %v726 = vadd.f32 %v724, %v725
  %v727 = vsel %vm62, %v721, 0.0
  %v728 = vadd.f32 %v726, %v727
  %v729 = vrot.slane %v728, 4
  %v730 = vadd.f32 %v728, %v729
  %v731 = vrot.slane %v730, 2
  %v732 = vadd.f32 %v730, %v731
  %v733 = vrot.slane %v732, 1
  %v734 = vadd.f32 %v732, %v733
  %v735 = vsel %vm54, %v717, %v734
  %v736 = vld [vmem:[%s4] sm:$0xff]
  %v737 = vld [vmem:[%s4 + $0x8] sm:$0xff]
  %v738 = vld [vmem:[%s4 + $0x10] sm:$0xff]
  %v739 = vld [vmem:[%s4 + $0x18] sm:$0xff]
  %v740 = vld [vmem:[%s4 + $0x20] sm:$0xff]
  %v741 = vld [vmem:[%s4 + $0x28] sm:$0xff]
  %v742 = vld [vmem:[%s4 + $0x30] sm:$0xff]
  %v743 = vld [vmem:[%s4 + $0x38] sm:$0xff]
  %v745 = vsel %vm62, %v735, 0
  %747 = vmatprep.subr.mxu0 0.0
  %748 = vmatpush1.msra.mxu0 0.0
  %749 = vmatprep.subr.mxu0 0.0
  %750 = vmatpush1.msra.mxu0 0.0
  %751 = vmatprep.subr.mxu0 0.0
  %752 = vmatpush1.msra.mxu0 0.0
  %753 = vmatprep.subr.mxu0 0.0
  %754 = vmatpush1.msra.mxu0 0.0
  %755 = vmatprep.subr.mxu0 0.0
  %756 = vmatpush1.msra.mxu0 0.0
  %757 = vmatprep.subr.mxu0 0.0
  %758 = vmatpush1.msra.mxu0 0.0
  %759 = vmatprep.subr.mxu0 0.0
  %760 = vmatpush1.msra.mxu0 0.0
  %761 = vmatprep.subr.mxu0 0.0
  %762 = vmatpush1.msra.mxu0 0.0
  %763 = vmatprep.subr.mxu0 0.0
  %764 = vmatpush1.msra.mxu0 %v743
  %765 = vmatprep.subr.mxu0 0.0
  %766 = vmatpush1.msra.mxu0 %v742
  %767 = vmatprep.subr.mxu0 0.0
  %768 = vmatpush1.msra.mxu0 %v741
  %769 = vmatprep.subr.mxu0 0.0
  %770 = vmatpush1.msra.mxu0 %v740
  %771 = vmatprep.subr.mxu0 0.0
  %772 = vmatpush1.msra.mxu0 %v739
  %773 = vmatprep.subr.mxu0 0.0
  %774 = vmatpush1.msra.mxu0 %v738
  %775 = vmatprep.subr.mxu0 0.0
  %776 = vmatpush1.msra.mxu0 %v737
  %777 = vmatprep.subr.mxu0 0.0
  %778 = vmatpush1.msra.mxu0 %v736
  %779 = vmatprep.subr.mxu0 0.0
  %780 = vmatpush2.msra.mxu0 0.0
  %781 = vmatprep.subr.mxu0 0.0
  %782 = vmatpush2.msra.mxu0 0.0
  %783 = vmatprep.subr.mxu0 0.0
  %784 = vmatpush2.msra.mxu0 0.0
  %785 = vmatprep.subr.mxu0 0.0
  %786 = vmatpush2.msra.mxu0 0.0
  %787 = vmatprep.subr.mxu0 0.0
  %788 = vmatpush2.msra.mxu0 0.0
  %789 = vmatprep.subr.mxu0 0.0
  %790 = vmatpush2.msra.mxu0 0.0
  %791 = vmatprep.subr.mxu0 0.0
  %792 = vmatpush2.msra.mxu0 0.0
  %793 = vmatprep.subr.mxu0 0.0
  %794 = vmatpush2.msra.mxu0 0.0
  %795 = vmatprep.subr.mxu0 0.0
  %796 = vmatpush2.msra.mxu0 0.0
  %797 = vmatprep.subr.mxu0 0.0
  %798 = vmatpush2.msra.mxu0 0.0
  %799 = vmatprep.subr.mxu0 0.0
  %800 = vmatpush2.msra.mxu0 0.0
  %801 = vmatprep.subr.mxu0 0.0
  %802 = vmatpush2.msra.mxu0 0.0
  %803 = vmatprep.subr.mxu0 0.0
  %804 = vmatpush2.msra.mxu0 0.0
  %805 = vmatprep.subr.mxu0 0.0
  %806 = vmatpush2.msra.mxu0 0.0
  %807 = vmatprep.subr.mxu0 0.0
  %808 = vmatpush2.msra.mxu0 0.0
  %809 = vmatprep.subr.mxu0 0.0
  %810 = vmatpush2.msra.mxu0 0.0
  %811 = vmatprep.mubr.f32.mxu0 0.0
  %812 = vmatmul.mubr.f32.gmra.mxu0 %v745
  %v813 = vpop.f32.mrf.mxu0
  %v814 = vadd.f32 0.0, %v813
  %v815 = vpop.f32.mrf.mxu0
  %816 = vdwg.mxu0
  %v817 = vld [vmem:[%s5] sm:$0xf]
  %v819 = vsel %vm370, %v814, 0
  %v822 = vsel %vm374, %v817, 0
  %824 = vmatprep.subr.mxu0 0.0
  %825 = vmatpush1.msra.mxu0 0.0
  %826 = vmatprep.subr.mxu0 0.0
  %827 = vmatpush1.msra.mxu0 0.0
  %828 = vmatprep.subr.mxu0 0.0
  %829 = vmatpush1.msra.mxu0 0.0
  %830 = vmatprep.subr.mxu0 0.0
  %831 = vmatpush1.msra.mxu0 0.0
  %832 = vmatprep.subr.mxu0 0.0
  %833 = vmatpush1.msra.mxu0 0.0
  %834 = vmatprep.subr.mxu0 0.0
  %835 = vmatpush1.msra.mxu0 0.0
  %836 = vmatprep.subr.mxu0 0.0
  %837 = vmatpush1.msra.mxu0 0.0
  %838 = vmatprep.subr.mxu0 0.0
  %839 = vmatpush1.msra.mxu0 0.0
  %840 = vmatprep.subr.mxu0 0.0
  %841 = vmatpush1.msra.mxu0 0.0
  %842 = vmatprep.subr.mxu0 0.0
  %843 = vmatpush1.msra.mxu0 0.0
  %844 = vmatprep.subr.mxu0 0.0
  %845 = vmatpush1.msra.mxu0 0.0
  %846 = vmatprep.subr.mxu0 0.0
  %847 = vmatpush1.msra.mxu0 0.0
  %848 = vmatprep.subr.mxu0 0.0
  %849 = vmatpush1.msra.mxu0 0.0
  %850 = vmatprep.subr.mxu0 0.0
  %851 = vmatpush1.msra.mxu0 0.0
  %852 = vmatprep.subr.mxu0 0.0
  %853 = vmatpush1.msra.mxu0 0.0
  %854 = vmatprep.subr.mxu0 0.0
  %855 = vmatpush1.msra.mxu0 %v822
  %856 = vmatprep.subr.mxu0 0.0
  %857 = vmatpush2.msra.mxu0 0.0
  %858 = vmatprep.subr.mxu0 0.0
  %859 = vmatpush2.msra.mxu0 0.0
  %860 = vmatprep.subr.mxu0 0.0
  %861 = vmatpush2.msra.mxu0 0.0
  %862 = vmatprep.subr.mxu0 0.0
  %863 = vmatpush2.msra.mxu0 0.0
  %864 = vmatprep.subr.mxu0 0.0
  %865 = vmatpush2.msra.mxu0 0.0
  %866 = vmatprep.subr.mxu0 0.0
  %867 = vmatpush2.msra.mxu0 0.0
  %868 = vmatprep.subr.mxu0 0.0
  %869 = vmatpush2.msra.mxu0 0.0
  %870 = vmatprep.subr.mxu0 0.0
  %871 = vmatpush2.msra.mxu0 0.0
  %872 = vmatprep.subr.mxu0 0.0
  %873 = vmatpush2.msra.mxu0 0.0
  %874 = vmatprep.subr.mxu0 0.0
  %875 = vmatpush2.msra.mxu0 0.0
  %876 = vmatprep.subr.mxu0 0.0
  %877 = vmatpush2.msra.mxu0 0.0
  %878 = vmatprep.subr.mxu0 0.0
  %879 = vmatpush2.msra.mxu0 0.0
  %880 = vmatprep.subr.mxu0 0.0
  %881 = vmatpush2.msra.mxu0 0.0
  %882 = vmatprep.subr.mxu0 0.0
  %883 = vmatpush2.msra.mxu0 0.0
  %884 = vmatprep.subr.mxu0 0.0
  %885 = vmatpush2.msra.mxu0 0.0
  %886 = vmatprep.subr.mxu0 0.0
  %887 = vmatpush2.msra.mxu0 0.0
  %888 = vmatprep.mubr.f32.mxu0 0.0
  %889 = vmatmul.mubr.f32.gmra.mxu0 %v819
  %v890 = vpop.f32.mrf.mxu0
  %v891 = vadd.f32 0.0, %v890
  %v892 = vpop.f32.mrf.mxu0
  %893 = vdwg.mxu0
  %v894 = vmul.f32 %v891, %v891
  %v896 = vrot.slane %v894, 7
  %v898 = vsub.f32 %v891, %v896
  %v899 = vadd.f32 %v898, 1e-05
  %v900 = vrsqrt.pop %v899
  %v902 = vrot.slane %v703, 7
  %v904 = vmul.f32 %v900, %v902
  %v905 = vlaneseq
  %v906 = vshrl.u32 %v905, 7
  %v907 = vsub.s32 0, %v906
  %v908 = vrot.slane %v891, %v907
  %v909 = vsub.f32 %v689, %v908
  %v910 = vsub.f32 %v692, %v908
  %v911 = vsub.f32 %v697, %v908
  %v912 = vsub.f32 %v700, %v908
  %v913 = vlaneseq
  %v914 = vshrl.u32 %v913, 7
  %v915 = vsub.s32 1, %v914
  %v916 = vrot.slane %v904, %v915
  %v917 = vmul.f32 %v909, %v916
  %v918 = vmul.f32 %v910, %v916
  %v919 = vmul.f32 %v911, %v916
  %v920 = vmul.f32 %v912, %v916
  %v921 = vlaneseq
  %v922 = vshrl.u32 %v921, 7
  %v923 = vsub.s32 0, %v922
  %v924 = vrot.slane %v704, %v923
  %v925 = vadd.f32 %v917, %v924
  %v926 = vadd.f32 %v918, %v924
  %v927 = vadd.f32 %v919, %v924
  %v928 = vadd.f32 %v920, %v924
  %v929 = vadd.f32 %v925, %v24
  %v930 = vadd.f32 %v926, %v25
  %v931 = vadd.f32 %v927, %v26
  %v932 = vadd.f32 %v928, %v27
  %v933 = vmax.f32 %v929, 0.0
  %v934 = vmax.f32 %v930, 0.0
  %v935 = vmax.f32 %v931, 0.0
  %v936 = vmax.f32 %v932, 0.0
  %937 = vst.msk [vmem:[%s6] sm:$0xff] %vm62, %v933
  %938 = vst.msk [vmem:[%s6 + $0x8] sm:$0xff] %vm62, %v934
  %939 = vst.msk [vmem:[%s6 + $0x10] sm:$0xff] %vm62, %v935
  %940 = vst.msk [vmem:[%s6 + $0x18] sm:$0xff] %vm62, %v936
  // Predicated region
  $region26: #{residual_block_pallas.1} parent=0 // pred_check
    _
  $region27: #{residual_block_pallas.1} parent=0 // pred_check_branch
    %942 = sbr.rel (0) target = $region29
  $region28: #{residual_block_pallas.1} parent=0 // pred_region
    _
  $region29: #{residual_block_pallas.1} parent=0 // pred_fallthru
    _
  // Predicated region
  $region30: #{residual_block_pallas.1} parent=0 // pred_check
    _
  $region31: #{residual_block_pallas.1} parent=0 // pred_check_branch
    %944 = sbr.rel (0) target = $region33
  $region32: #{residual_block_pallas.1} parent=0 // pred_region
    _
  $region33: #{residual_block_pallas.1} parent=0 // pred_fallthru
    _

</llo_original>
